<compile_context>
chip_gen: v7x
topology: tpu7x:2x2x1
jax: 0.10.0
libtpu: 0.0.40
codegen_flags: <defaults>
</compile_context>

<pallas_src>
import jax
import jax.numpy as jnp
from jax.experimental import pallas as pl
from jax.experimental.pallas import tpu as pltpu

NEG_SLOPE = 0.01  # nn.LeakyReLU default


def _leaky_relu(x):
    return jnp.where(x >= 0, x, NEG_SLOPE * x)


def _round_up(x, m):
    return (x + m - 1) // m * m


def mlp_kernel(x_ref, w1_ref, b1_ref, w2_ref, b2_ref, w3_ref, b3_ref, o_ref):
    # linear1 -> dropout (identity in eval) -> LeakyReLU
    h = jnp.dot(x_ref[...], w1_ref[...], preferred_element_type=jnp.float32)
    h = _leaky_relu(h + b1_ref[...])

    # linear2 -> dropout (identity in eval) -> LeakyReLU
    h = jnp.dot(h.astype(w2_ref.dtype), w2_ref[...],
                preferred_element_type=jnp.float32)
    h = _leaky_relu(h + b2_ref[...])

    # linear3
    out = jnp.dot(h.astype(w3_ref.dtype), w3_ref[...],
                  preferred_element_type=jnp.float32)
    o_ref[...] = (out + b3_ref[...]).astype(o_ref.dtype)


def linear_projection(x, params, *, block_b=512):
    """x: [..., in_features] -> [..., out_features]."""
    (w1, b1), (w2, b2), (w3, b3) = params
    in_features, hidden_features = w1.shape
    out_features = w3.shape[1]

    lead = x.shape[:-1]
    x2d = x.reshape(-1, in_features)
    B = x2d.shape[0]

    # Lane-dense / MXU-friendly padded feature sizes.
    IN_P = _round_up(in_features, 128)
    HID_P = _round_up(hidden_features, 128)
    OUT_P = _round_up(out_features, 128)

    # Batch tile: multiple of 16 (bf16 sublane packing); pipelined over the grid.
    TB = min(block_b, _round_up(B, 16))
    B_pad = _round_up(B, TB)
    grid = (B_pad // TB,)

    # Zero-pad so padded rows/columns contribute exactly zero; bf16 MXU operands.
    def pad2(a, r, c, dtype):
        return jnp.zeros((r, c), dtype).at[: a.shape[0], : a.shape[1]].set(
            a.astype(dtype))

    xp = pad2(x2d, B_pad, IN_P, jnp.bfloat16)
    w1p = pad2(w1, IN_P, HID_P, jnp.bfloat16)
    w2p = pad2(w2, HID_P, HID_P, jnp.bfloat16)
    w3p = pad2(w3, HID_P, OUT_P, jnp.bfloat16)
    b1p = pad2(b1.reshape(1, -1), 1, HID_P, jnp.float32)
    b2p = pad2(b2.reshape(1, -1), 1, HID_P, jnp.float32)
    b3p = pad2(b3.reshape(1, -1), 1, OUT_P, jnp.float32)

    # Weights/biases: full block, same index every grid step -> VMEM-resident.
    def resident(a):
        return pl.BlockSpec(a.shape, lambda i: (0,) * a.ndim)

    flops = 2 * B_pad * (IN_P * HID_P + HID_P * HID_P + HID_P * OUT_P)
    bytes_accessed = (
        xp.size * 2
        + (w1p.size + w2p.size + w3p.size) * 2
        + (b1p.size + b2p.size + b3p.size) * 4
        + B_pad * OUT_P * 4
    )

    # VMEM budget from actual footprint (double-buffered x/out tiles + resident
    # weights/biases + hidden activations), with 2x headroom, capped well below
    # v7x's 64 MiB per-TensorCore physical VMEM.
    tile_bytes = 2 * (TB * IN_P * 2 + TB * OUT_P * 4)
    weight_bytes = ((w1p.size + w2p.size + w3p.size) * 2
                    + (b1p.size + b2p.size + b3p.size) * 4)
    act_bytes = 2 * TB * HID_P * 4
    vmem_limit = int(min(48 << 20,
                         max(16 << 20, 2 * (tile_bytes + weight_bytes + act_bytes))))

    out2d = pl.pallas_call(
        mlp_kernel,
        out_shape=jax.ShapeDtypeStruct((B_pad, OUT_P), jnp.float32),
        grid=grid,
        in_specs=[
            pl.BlockSpec((TB, IN_P), lambda i: (i, 0)),
            resident(w1p), resident(b1p),
            resident(w2p), resident(b2p),
            resident(w3p), resident(b3p),
        ],
        out_specs=pl.BlockSpec((TB, OUT_P), lambda i: (i, 0)),
        compiler_params=pltpu.CompilerParams(
            dimension_semantics=("parallel",),
            vmem_limit_bytes=vmem_limit,
        ),
        cost_estimate=pl.CostEstimate(
            flops=flops, transcendentals=0, bytes_accessed=bytes_accessed),
    )(xp, w1p, b1p, w2p, b2p, w3p, b3p)

    return out2d[:B, :out_features].reshape(*lead, out_features)


def init_params(key, in_features, hidden_features, out_features):
    """Deterministic init mimicking nn.Linear's kaiming-uniform-ish ranges."""
    def linear_init(k, fan_in, fan_out):
        kw, kb = jax.random.split(k)
        bound = 1.0 / jnp.sqrt(fan_in)
        # stored pre-transposed: (fan_in, fan_out) so the kernel does x @ W
        w = jax.random.uniform(kw, (fan_in, fan_out), jnp.float32, -bound, bound)
        b = jax.random.uniform(kb, (1, fan_out), jnp.float32, -bound, bound)
        return w, b

    k1, k2, k3 = jax.random.split(key, 3)
    return (
        linear_init(k1, in_features, hidden_features),
        linear_init(k2, hidden_features, hidden_features),
        linear_init(k3, hidden_features, out_features),
    )


def reference_bf16(x, params):
    """Pure-JAX reference matching the kernel's bf16-operand / f32-accumulate math."""
    (w1, b1), (w2, b2), (w3, b3) = params

    def lin(a, w, b):
        return jnp.dot(a.astype(jnp.bfloat16), w.astype(jnp.bfloat16),
                       preferred_element_type=jnp.float32) + b

    h = _leaky_relu(lin(x, w1, b1))
    h = _leaky_relu(lin(h, w2, b2))
    return lin(h, w3, b3)


def reference_f32(x, params):
    (w1, b1), (w2, b2), (w3, b3) = params
    h = _leaky_relu(x @ w1 + b1)
    h = _leaky_relu(h @ w2 + b2)
    return h @ w3 + b3


if __name__ == "__main__":
    key = jax.random.PRNGKey(0)
    kx, kp = jax.random.split(key)

    in_features, hidden_features, out_features = 32, 64, 4
    batch = 8

    x = jax.random.normal(kx, (batch, in_features), dtype=jnp.float32)
    params = init_params(kp, in_features, hidden_features, out_features)

    out = linear_projection(x, params)
    out = jax.block_until_ready(out)

    assert out.shape == (batch, out_features)
    # Tight check vs. a reference with matching bf16-operand / f32-accumulate math.
    ref_bf16 = reference_bf16(x, params)
    assert jnp.allclose(out, ref_bf16, atol=2e-3, rtol=2e-3)
    # Loose sanity check vs. full-f32 math (bf16 input rounding only).
    ref_f32 = reference_f32(x, params)
    assert jnp.allclose(out, ref_f32, atol=5e-2, rtol=5e-2)

    print("KERNEL_OK")
</pallas_src>

<mosaic_0001>
module attributes {stable_mosaic.version = 11 : i64} {
  func.func @mlp_kernel(%arg0: i32, %arg1: memref<16x128xbf16, #tpu.memory_space<vmem>>, %arg2: memref<128x128xbf16, #tpu.memory_space<vmem>>, %arg3: memref<1x128xf32, #tpu.memory_space<vmem>>, %arg4: memref<128x128xbf16, #tpu.memory_space<vmem>>, %arg5: memref<1x128xf32, #tpu.memory_space<vmem>>, %arg6: memref<128x128xbf16, #tpu.memory_space<vmem>>, %arg7: memref<1x128xf32, #tpu.memory_space<vmem>>, %arg8: memref<16x128xf32, #tpu.memory_space<vmem>>) attributes {dimension_semantics = [#tpu.dimension_semantics<parallel>], iteration_bounds = array<i64: 1>, scalar_prefetch = 0 : i64, scratch_operands = 0 : i64, tpu.core_type = #tpu.core_type<tc>, window_params = [{transform_indices = @transform_0, window_bounds = array<i64: 16, 128>}, {pipeline_mode = #tpu.pipeline_mode<synchronous>, transform_indices = @transform_1, window_bounds = array<i64: 128, 128>}, {pipeline_mode = #tpu.pipeline_mode<synchronous>, transform_indices = @transform_2, window_bounds = array<i64: 1, 128>}, {pipeline_mode = #tpu.pipeline_mode<synchronous>, transform_indices = @transform_3, window_bounds = array<i64: 128, 128>}, {pipeline_mode = #tpu.pipeline_mode<synchronous>, transform_indices = @transform_4, window_bounds = array<i64: 1, 128>}, {pipeline_mode = #tpu.pipeline_mode<synchronous>, transform_indices = @transform_5, window_bounds = array<i64: 128, 128>}, {pipeline_mode = #tpu.pipeline_mode<synchronous>, transform_indices = @transform_6, window_bounds = array<i64: 1, 128>}, {transform_indices = @transform_7, window_bounds = array<i64: 16, 128>}]} {
    %c0 = arith.constant 0 : index
    %c0_0 = arith.constant 0 : index
    %0 = vector.load %arg1[%c0, %c0_0] : memref<16x128xbf16, #tpu.memory_space<vmem>>, vector<16x128xbf16>
    %c0_1 = arith.constant 0 : index
    %c0_2 = arith.constant 0 : index
    %1 = vector.load %arg2[%c0_1, %c0_2] : memref<128x128xbf16, #tpu.memory_space<vmem>>, vector<128x128xbf16>
    %cst = arith.constant dense<0.000000e+00> : vector<16x128xf32>
    %2 = tpu.matmul %0, %1, %cst {dimension_numbers = #tpu.dot_dimension_numbers<[1], [0], [0], [1], [0, 0, 1, 1], [], []>} : vector<16x128xbf16>, vector<128x128xbf16>, vector<16x128xf32> -> vector<16x128xf32>
    %c0_3 = arith.constant 0 : index
    %c0_4 = arith.constant 0 : index
    %3 = vector.load %arg3[%c0_3, %c0_4] : memref<1x128xf32, #tpu.memory_space<vmem>>, vector<1x128xf32>
    %4 = vector.broadcast %3 : vector<1x128xf32> to vector<16x128xf32>
    %5 = arith.addf %2, %4 : vector<16x128xf32>
    %cst_5 = arith.constant 0.000000e+00 : f32
    %6 = vector.broadcast %cst_5 : f32 to vector<16x128xf32>
    %7 = arith.cmpf oge, %5, %6 : vector<16x128xf32>
    %cst_6 = arith.constant 0.00999999977 : f32
    %8 = vector.broadcast %cst_6 : f32 to vector<16x128xf32>
    %9 = arith.mulf %8, %5 : vector<16x128xf32>
    %10 = arith.select %7, %5, %9 : vector<16x128xi1>, vector<16x128xf32>
    %11 = arith.truncf %10 : vector<16x128xf32> to vector<16x128xbf16>
    %c0_7 = arith.constant 0 : index
    %c0_8 = arith.constant 0 : index
    %12 = vector.load %arg4[%c0_7, %c0_8] : memref<128x128xbf16, #tpu.memory_space<vmem>>, vector<128x128xbf16>
    %cst_9 = arith.constant dense<0.000000e+00> : vector<16x128xf32>
    %13 = tpu.matmul %11, %12, %cst_9 {dimension_numbers = #tpu.dot_dimension_numbers<[1], [0], [0], [1], [0, 0, 1, 1], [], []>} : vector<16x128xbf16>, vector<128x128xbf16>, vector<16x128xf32> -> vector<16x128xf32>
    %c0_10 = arith.constant 0 : index
    %c0_11 = arith.constant 0 : index
    %14 = vector.load %arg5[%c0_10, %c0_11] : memref<1x128xf32, #tpu.memory_space<vmem>>, vector<1x128xf32>
    %15 = vector.broadcast %14 : vector<1x128xf32> to vector<16x128xf32>
    %16 = arith.addf %13, %15 : vector<16x128xf32>
    %cst_12 = arith.constant 0.000000e+00 : f32
    %17 = vector.broadcast %cst_12 : f32 to vector<16x128xf32>
    %18 = arith.cmpf oge, %16, %17 : vector<16x128xf32>
    %cst_13 = arith.constant 0.00999999977 : f32
    %19 = vector.broadcast %cst_13 : f32 to vector<16x128xf32>
    %20 = arith.mulf %19, %16 : vector<16x128xf32>
    %21 = arith.select %18, %16, %20 : vector<16x128xi1>, vector<16x128xf32>
    %22 = arith.truncf %21 : vector<16x128xf32> to vector<16x128xbf16>
    %c0_14 = arith.constant 0 : index
    %c0_15 = arith.constant 0 : index
    %23 = vector.load %arg6[%c0_14, %c0_15] : memref<128x128xbf16, #tpu.memory_space<vmem>>, vector<128x128xbf16>
    %cst_16 = arith.constant dense<0.000000e+00> : vector<16x128xf32>
    %24 = tpu.matmul %22, %23, %cst_16 {dimension_numbers = #tpu.dot_dimension_numbers<[1], [0], [0], [1], [0, 0, 1, 1], [], []>} : vector<16x128xbf16>, vector<128x128xbf16>, vector<16x128xf32> -> vector<16x128xf32>
    %c0_17 = arith.constant 0 : index
    %c0_18 = arith.constant 0 : index
    %25 = vector.load %arg7[%c0_17, %c0_18] : memref<1x128xf32, #tpu.memory_space<vmem>>, vector<1x128xf32>
    %26 = vector.broadcast %25 : vector<1x128xf32> to vector<16x128xf32>
    %27 = arith.addf %24, %26 : vector<16x128xf32>
    %c0_19 = arith.constant 0 : index
    %c0_20 = arith.constant 0 : index
    %28 = vector.load %arg8[%c0_19, %c0_20] : memref<16x128xf32, #tpu.memory_space<vmem>>, vector<16x128xf32>
    tpu.vector_store %arg8[%c0_19, %c0_20], %27 {strides = array<i32>} : memref<16x128xf32, #tpu.memory_space<vmem>>, vector<16x128xf32>,
    return
  }
  func.func @transform_0(%arg0: i32) -> (i32, i32) {
    %c0_i32 = arith.constant 0 : i32
    %c0_i32_0 = arith.constant 0 : i32
    return %arg0, %c0_i32 : i32, i32
  }
  func.func @transform_1(%arg0: i32) -> (i32, i32) {
    %c0_i32 = arith.constant 0 : i32
    %c0_i32_0 = arith.constant 0 : i32
    %c0_i32_1 = arith.constant 0 : i32
    return %c0_i32, %c0_i32_0 : i32, i32
  }
  func.func @transform_2(%arg0: i32) -> (i32, i32) {
    %c0_i32 = arith.constant 0 : i32
    %c0_i32_0 = arith.constant 0 : i32
    %c0_i32_1 = arith.constant 0 : i32
    return %c0_i32, %c0_i32_0 : i32, i32
  }
  func.func @transform_3(%arg0: i32) -> (i32, i32) {
    %c0_i32 = arith.constant 0 : i32
    %c0_i32_0 = arith.constant 0 : i32
    %c0_i32_1 = arith.constant 0 : i32
    return %c0_i32, %c0_i32_0 : i32, i32
  }
  func.func @transform_4(%arg0: i32) -> (i32, i32) {
    %c0_i32 = arith.constant 0 : i32
    %c0_i32_0 = arith.constant 0 : i32
    %c0_i32_1 = arith.constant 0 : i32
    return %c0_i32, %c0_i32_0 : i32, i32
  }
  func.func @transform_5(%arg0: i32) -> (i32, i32) {
    %c0_i32 = arith.constant 0 : i32
    %c0_i32_0 = arith.constant 0 : i32
    %c0_i32_1 = arith.constant 0 : i32
    return %c0_i32, %c0_i32_0 : i32, i32
  }
  func.func @transform_6(%arg0: i32) -> (i32, i32) {
    %c0_i32 = arith.constant 0 : i32
    %c0_i32_0 = arith.constant 0 : i32
    %c0_i32_1 = arith.constant 0 : i32
    return %c0_i32, %c0_i32_0 : i32, i32
  }
  func.func @transform_7(%arg0: i32) -> (i32, i32) {
    %c0_i32 = arith.constant 0 : i32
    %c0_i32_0 = arith.constant 0 : i32
    return %arg0, %c0_i32 : i32, i32
  }
}

</mosaic_0001>

<llo_original>
// kernel: tpu_custom_call.1
$region0: #{tpu_custom_call.1}
  #allocation0 [shape = 'u32[]', space=smem, size = 0x4, offset = 0x4, fixed_abs, tag = 'smem constant byte address 0x4 - core index']
  #allocation1 [shape = 'u32[144,128]{1,0:T(1,128)}', space=vmem, size = 0x12000, scoped, tag = 'internal scratch']
  %s0 = inlined_call_operand.hbm [shape: bf16[16,128], index: 0, kind: input, shape index: {}]
  %s1 = inlined_call_operand.hbm [shape: bf16[128,128], index: 1, kind: input, shape index: {}]
  %s2 = inlined_call_operand.vmem [shape: f32[1,128], index: 2, kind: input, shape index: {}]
  %s3 = inlined_call_operand.hbm [shape: bf16[128,128], index: 3, kind: input, shape index: {}]
  %s4 = inlined_call_operand.vmem [shape: f32[1,128], index: 4, kind: input, shape index: {}]
  %s5 = inlined_call_operand.hbm [shape: bf16[128,128], index: 5, kind: input, shape index: {}]
  %s6 = inlined_call_operand.vmem [shape: f32[1,128], index: 6, kind: input, shape index: {}]
  %s7 = inlined_call_operand.hbm [shape: f32[16,128], index: 7, kind: output, shape index: {}]
  %s8 = sld [smem:[#allocation0]]
  $region54: #{tpu_custom_call.1} parent=0
    _
  %s10 = ssub.s32 1, %s8
  %s11 = scalar_select 0, %s10, %s8
  $region1: #{tpu_custom_call.1} parent=0
    #allocation2 [shape = 'u8[4096]{0}', space=vmem, size = 0x1000, scoped, tag = 'input window, operand 0, single buffered']
    #allocation3 [shape = 's32[1]{0}', space=sflag, size = 0x4, scoped, tag = 'scoped memory for tpu_custom_call.1']
    #allocation4 [shape = 's32[1]{0}', space=sflag, size = 0x4, scoped, tag = 'scoped memory for tpu_custom_call.1']
    #allocation5 [shape = 'u8[32768]{0}', space=vmem, size = 0x8000, scoped, tag = 'input window, operand 1, single buffered']
    #allocation6 [shape = 's32[1]{0}', space=sflag, size = 0x4, scoped, tag = 'scoped memory for tpu_custom_call.1']
    #allocation7 [shape = 'u8[32768]{0}', space=vmem, size = 0x8000, scoped, tag = 'input window, operand 3, single buffered']
    #allocation8 [shape = 'u8[32768]{0}', space=vmem, size = 0x8000, scoped, tag = 'input window, operand 5, single buffered']
    #allocation9 [shape = 's32[1]{0}', space=sflag, size = 0x4, scoped, tag = 'scoped memory for tpu_custom_call.1']
    #allocation10 [shape = 'u8[8192]{0}', space=vmem, size = 0x2000, scoped, tag = 'output window, operand 0, single buffered']
    %12 = vsyncpa [#allocation3], 0
    %13 = vsyncpa [#allocation6], 0
    %14 = vsyncpa [#allocation9], 0
    %15 = vsyncpa [#allocation4], 0
    // Predicated region
    $region2: #{tpu_custom_call.1} parent=1 // pred_check
      _
    $region3: #{tpu_custom_call.1} parent=1 // pred_check_branch
      %17 = sbr.rel (0) target = $region5
    $region4: #{tpu_custom_call.1} parent=1 // pred_region
      %s19 = ssub.s32 128, 128
      %20 = vsyncadd [#allocation3], %s19
      %s21 = sshll.u32 [#allocation2], 4
      %s22 = int_to_ptr.vmem [resolvable:$true] %s21
      %27 = dma.hbm_to_vmem [thread:$0]  %s0, 128, %s22, [#allocation3], 64, 64, 4
    $region5: #{tpu_custom_call.1} parent=1 // pred_fallthru
      _
    // Predicated region
    $region6: #{tpu_custom_call.1} parent=1 // pred_check
      _
    $region7: #{tpu_custom_call.1} parent=1 // pred_check_branch
      %29 = sbr.rel (0) target = $region9
    $region8: #{tpu_custom_call.1} parent=1 // pred_region
      %s31 = ssub.s32 1024, 1024
      %32 = vsyncadd [#allocation6], %s31
      %s33 = sshll.u32 [#allocation5], 4
      %s34 = int_to_ptr.vmem [resolvable:$true] %s33
      %39 = dma.hbm_to_vmem [thread:$0]  %s1, 1024, %s34, [#allocation6], 64, 64, 4
    $region9: #{tpu_custom_call.1} parent=1 // pred_fallthru
      _
    // Predicated region
    $region10: #{tpu_custom_call.1} parent=1 // pred_check
      _
    $region11: #{tpu_custom_call.1} parent=1 // pred_check_branch
      %41 = sbr.rel (0) target = $region13
    $region12: #{tpu_custom_call.1} parent=1 // pred_region
      _
    $region13: #{tpu_custom_call.1} parent=1 // pred_fallthru
      _
    // Predicated region
    $region14: #{tpu_custom_call.1} parent=1 // pred_check
      _
    $region15: #{tpu_custom_call.1} parent=1 // pred_check_branch
      %43 = sbr.rel (0) target = $region17
    $region16: #{tpu_custom_call.1} parent=1 // pred_region
      %s45 = ssub.s32 1024, 1024
      %46 = vsyncadd [#allocation6], %s45
      %s47 = sshll.u32 [#allocation7], 4
      %s48 = int_to_ptr.vmem [resolvable:$true] %s47
      %53 = dma.hbm_to_vmem [thread:$0]  %s3, 1024, %s48, [#allocation6], 64, 64, 4
    $region17: #{tpu_custom_call.1} parent=1 // pred_fallthru
      _
    // Predicated region
    $region18: #{tpu_custom_call.1} parent=1 // pred_check
      _
    $region19: #{tpu_custom_call.1} parent=1 // pred_check_branch
      %55 = sbr.rel (0) target = $region21
    $region20: #{tpu_custom_call.1} parent=1 // pred_region
      _
    $region21: #{tpu_custom_call.1} parent=1 // pred_fallthru
      _
    // Predicated region
    $region22: #{tpu_custom_call.1} parent=1 // pred_check
      _
    $region23: #{tpu_custom_call.1} parent=1 // pred_check_branch
      %57 = sbr.rel (0) target = $region25
    $region24: #{tpu_custom_call.1} parent=1 // pred_region
      %s59 = ssub.s32 1024, 1024
      %60 = vsyncadd [#allocation9], %s59
      %s61 = sshll.u32 [#allocation8], 4
      %s62 = int_to_ptr.vmem [resolvable:$true] %s61
      %67 = dma.hbm_to_vmem [thread:$0]  %s5, 1024, %s62, [#allocation9], 64, 64, 4
    $region25: #{tpu_custom_call.1} parent=1 // pred_fallthru
      _
    // Predicated region
    $region26: #{tpu_custom_call.1} parent=1 // pred_check
      _
    $region27: #{tpu_custom_call.1} parent=1 // pred_check_branch
      %69 = sbr.rel (0) target = $region29
    $region28: #{tpu_custom_call.1} parent=1 // pred_region
      _
    $region29: #{tpu_custom_call.1} parent=1 // pred_fallthru
      _
    // Predicated region
    $region30: #{tpu_custom_call.1} parent=1 // pred_check
      _
    $region31: #{tpu_custom_call.1} parent=1 // pred_check_branch
      %71 = sbr.rel (0) target = $region33
    $region32: #{tpu_custom_call.1} parent=1 // pred_region
      %72 = dma.done [#allocation3], 128
    $region33: #{tpu_custom_call.1} parent=1 // pred_fallthru
      _
    // Predicated region
    $region34: #{tpu_custom_call.1} parent=1 // pred_check
      _
    $region35: #{tpu_custom_call.1} parent=1 // pred_check_branch
      %74 = sbr.rel (0) target = $region37
    $region36: #{tpu_custom_call.1} parent=1 // pred_region
      %75 = dma.done [#allocation6], 1024
    $region37: #{tpu_custom_call.1} parent=1 // pred_fallthru
      _
    // Predicated region
    $region38: #{tpu_custom_call.1} parent=1 // pred_check
      _
    $region39: #{tpu_custom_call.1} parent=1 // pred_check_branch
      %77 = sbr.rel (0) target = $region41
    $region40: #{tpu_custom_call.1} parent=1 // pred_region
      %78 = dma.done [#allocation6], 1024
    $region41: #{tpu_custom_call.1} parent=1 // pred_fallthru
      _
    // Predicated region
    $region42: #{tpu_custom_call.1} parent=1 // pred_check
      _
    $region43: #{tpu_custom_call.1} parent=1 // pred_check_branch
      %80 = sbr.rel (0) target = $region45
    $region44: #{tpu_custom_call.1} parent=1 // pred_region
      %81 = dma.done [#allocation9], 1024
    $region45: #{tpu_custom_call.1} parent=1 // pred_fallthru
      _
    %v83 = vld [vmem:[#allocation2] sm:$0xf]
    %v84 = vld [vmem:[#allocation2 + $0x4] sm:$0xf]
    %v85 = vld [vmem:[#allocation5] sm:$0xf]
    %v86 = vld [vmem:[#allocation5 + $0x4] sm:$0xf]
    %v87 = vld [vmem:[#allocation5 + $0x8] sm:$0xf]
    %v88 = vld [vmem:[#allocation5 + $0xc] sm:$0xf]
    %v89 = vld [vmem:[#allocation5 + $0x10] sm:$0xf]
    %v90 = vld [vmem:[#allocation5 + $0x14] sm:$0xf]
    %v91 = vld [vmem:[#allocation5 + $0x18] sm:$0xf]
    %v92 = vld [vmem:[#allocation5 + $0x1c] sm:$0xf]
    %v93 = vld [vmem:[#allocation5 + $0x20] sm:$0xf]
    %v94 = vld [vmem:[#allocation5 + $0x24] sm:$0xf]
    %v95 = vld [vmem:[#allocation5 + $0x28] sm:$0xf]
    %v96 = vld [vmem:[#allocation5 + $0x2c] sm:$0xf]
    %v97 = vld [vmem:[#allocation5 + $0x30] sm:$0xf]
    %v98 = vld [vmem:[#allocation5 + $0x34] sm:$0xf]
    %v99 = vld [vmem:[#allocation5 + $0x38] sm:$0xf]
    %v100 = vld [vmem:[#allocation5 + $0x3c] sm:$0xf]
    %v101 = vld [vmem:[%s2] sm:$0x1]
    %v103 = vlaneseq
    %v104 = vshrl.u32 %v103, 7
    %v105 = vsub.s32 0, %v104
    %v106 = vrot.slane %v101, %v105
    %v110 = vunpack.c.l.b16 %v83
    %v111 = vunpack.c.l.b16 %v84
    %v112 = vpack.c.b16 %v111, %v110
    %v130 = vunpack.c.l.b16 %v85
    %v131 = vunpack.c.l.b16 %v86
    %v132 = vunpack.c.l.b16 %v87
    %v133 = vunpack.c.l.b16 %v88
    %v134 = vunpack.c.l.b16 %v89
    %v135 = vunpack.c.l.b16 %v90
    %v136 = vunpack.c.l.b16 %v91
    %v137 = vunpack.c.l.b16 %v92
    %v138 = vunpack.c.l.b16 %v93
    %v139 = vunpack.c.l.b16 %v94
    %v140 = vunpack.c.l.b16 %v95
    %v141 = vunpack.c.l.b16 %v96
    %v142 = vunpack.c.l.b16 %v97
    %v143 = vunpack.c.l.b16 %v98
    %v144 = vunpack.c.l.b16 %v99
    %v145 = vunpack.c.l.b16 %v100
    %v146 = vpack.c.b16 %v131, %v130
    %v147 = vpack.c.b16 %v133, %v132
    %v148 = vpack.c.b16 %v135, %v134
    %v149 = vpack.c.b16 %v137, %v136
    %v150 = vpack.c.b16 %v139, %v138
    %v151 = vpack.c.b16 %v141, %v140
    %v152 = vpack.c.b16 %v143, %v142
    %v153 = vpack.c.b16 %v145, %v144
    %162 = vmatprep.subr.bf16.mxu0 0
    %163 = vmatpush1.bf16.msra.mxu0 %v146
    %164 = vmatprep.subr.bf16.mxu0 0
    %165 = vmatpush1.bf16.msra.mxu0 %v147
    %166 = vmatprep.subr.bf16.mxu0 0
    %167 = vmatpush1.bf16.msra.mxu0 %v148
    %168 = vmatprep.subr.bf16.mxu0 0
    %169 = vmatpush1.bf16.msra.mxu0 %v149
    %170 = vmatprep.subr.bf16.mxu0 0
    %171 = vmatpush1.bf16.msra.mxu0 %v150
    %172 = vmatprep.subr.bf16.mxu0 0
    %173 = vmatpush1.bf16.msra.mxu0 %v151
    %174 = vmatprep.subr.bf16.mxu0 0
    %175 = vmatpush1.bf16.msra.mxu0 %v152
    %176 = vmatprep.subr.bf16.mxu0 0
    %177 = vmatpush1.bf16.msra.mxu0 %v153
    %178 = vmatprep.subr.bf16.mxu0 0
    %179 = vmatpush1.bf16.msra.mxu0 0
    %180 = vmatprep.subr.bf16.mxu0 0
    %181 = vmatpush1.bf16.msra.mxu0 0
    %182 = vmatprep.subr.bf16.mxu0 0
    %183 = vmatpush1.bf16.msra.mxu0 0
    %184 = vmatprep.subr.bf16.mxu0 0
    %185 = vmatpush1.bf16.msra.mxu0 0
    %186 = vmatprep.subr.bf16.mxu0 0
    %187 = vmatpush1.bf16.msra.mxu0 0
    %188 = vmatprep.subr.bf16.mxu0 0
    %189 = vmatpush1.bf16.msra.mxu0 0
    %190 = vmatprep.subr.bf16.mxu0 0
    %191 = vmatpush1.bf16.msra.mxu0 0
    %192 = vmatprep.subr.bf16.mxu0 0
    %193 = vmatpush1.bf16.msra.mxu0 0
    %194 = vmatprep.mubr.bf16.mxu0 0
    %195 = vmatmul.mubr.bf16.gmra.mrb[0].mxu0 %v112
    %v196 = vpop.f32.mrb[0].mxu0
    %v197 = vadd.f32 %v106, %v196
    %v198 = vpop.f32.mrb[0].mxu0
    %v199 = vpop.f32.mrb[0].mxu0
    %v200 = vadd.f32 %v106, %v199
    %v201 = vpop.f32.mrb[0].mxu0
    %202 = vdwg.mxu0
    %vm203 = vcmp.ge.f32.partialorder %v197, 0.0
    %vm204 = vcmp.ge.f32.partialorder %v200, 0.0
    %v205 = vmul.f32 %v197, 0.01
    %v206 = vmul.f32 %v200, 0.01
    %v207 = vsel %vm203, %v197, %v205
    %v208 = vsel %vm204, %v200, %v206
    %v209 = vpack.c.bf16 %v208, %v207
    %v210 = vld [vmem:[#allocation7] sm:$0xf]
    %v211 = vld [vmem:[#allocation7 + $0x4] sm:$0xf]
    %v212 = vld [vmem:[#allocation7 + $0x8] sm:$0xf]
    %v213 = vld [vmem:[#allocation7 + $0xc] sm:$0xf]
    %v214 = vld [vmem:[#allocation7 + $0x10] sm:$0xf]
    %v215 = vld [vmem:[#allocation7 + $0x14] sm:$0xf]
    %v216 = vld [vmem:[#allocation7 + $0x18] sm:$0xf]
    %v217 = vld [vmem:[#allocation7 + $0x1c] sm:$0xf]
    %v218 = vld [vmem:[#allocation7 + $0x20] sm:$0xf]
    %v219 = vld [vmem:[#allocation7 + $0x24] sm:$0xf]
    %v220 = vld [vmem:[#allocation7 + $0x28] sm:$0xf]
    %v221 = vld [vmem:[#allocation7 + $0x2c] sm:$0xf]
    %v222 = vld [vmem:[#allocation7 + $0x30] sm:$0xf]
    %v223 = vld [vmem:[#allocation7 + $0x34] sm:$0xf]
    %v224 = vld [vmem:[#allocation7 + $0x38] sm:$0xf]
    %v225 = vld [vmem:[#allocation7 + $0x3c] sm:$0xf]
    %v226 = vld [vmem:[%s4] sm:$0x1]
    %v228 = vlaneseq
    %v229 = vshrl.u32 %v228, 7
    %v230 = vsub.s32 0, %v229
    %v231 = vrot.slane %v226, %v230
    %v249 = vunpack.c.l.b16 %v210
    %v250 = vunpack.c.l.b16 %v211
    %v251 = vunpack.c.l.b16 %v212
    %v252 = vunpack.c.l.b16 %v213
    %v253 = vunpack.c.l.b16 %v214
    %v254 = vunpack.c.l.b16 %v215
    %v255 = vunpack.c.l.b16 %v216
    %v256 = vunpack.c.l.b16 %v217
    %v257 = vunpack.c.l.b16 %v218
    %v258 = vunpack.c.l.b16 %v219
    %v259 = vunpack.c.l.b16 %v220
    %v260 = vunpack.c.l.b16 %v221
    %v261 = vunpack.c.l.b16 %v222
    %v262 = vunpack.c.l.b16 %v223
    %v263 = vunpack.c.l.b16 %v224
    %v264 = vunpack.c.l.b16 %v225
    %v265 = vpack.c.b16 %v250, %v249
    %v266 = vpack.c.b16 %v252, %v251
    %v267 = vpack.c.b16 %v254, %v253
    %v268 = vpack.c.b16 %v256, %v255
    %v269 = vpack.c.b16 %v258, %v257
    %v270 = vpack.c.b16 %v260, %v259
    %v271 = vpack.c.b16 %v262, %v261
    %v272 = vpack.c.b16 %v264, %v263
    %281 = vmatprep.subr.bf16.mxu0 0
    %282 = vmatpush1.bf16.msra.mxu0 %v265
    %283 = vmatprep.subr.bf16.mxu0 0
    %284 = vmatpush1.bf16.msra.mxu0 %v266
    %285 = vmatprep.subr.bf16.mxu0 0
    %286 = vmatpush1.bf16.msra.mxu0 %v267
    %287 = vmatprep.subr.bf16.mxu0 0
    %288 = vmatpush1.bf16.msra.mxu0 %v268
    %289 = vmatprep.subr.bf16.mxu0 0
    %290 = vmatpush1.bf16.msra.mxu0 %v269
    %291 = vmatprep.subr.bf16.mxu0 0
    %292 = vmatpush1.bf16.msra.mxu0 %v270
    %293 = vmatprep.subr.bf16.mxu0 0
    %294 = vmatpush1.bf16.msra.mxu0 %v271
    %295 = vmatprep.subr.bf16.mxu0 0
    %296 = vmatpush1.bf16.msra.mxu0 %v272
    %297 = vmatprep.subr.bf16.mxu0 0
    %298 = vmatpush1.bf16.msra.mxu0 0
    %299 = vmatprep.subr.bf16.mxu0 0
    %300 = vmatpush1.bf16.msra.mxu0 0
    %301 = vmatprep.subr.bf16.mxu0 0
    %302 = vmatpush1.bf16.msra.mxu0 0
    %303 = vmatprep.subr.bf16.mxu0 0
    %304 = vmatpush1.bf16.msra.mxu0 0
    %305 = vmatprep.subr.bf16.mxu0 0
    %306 = vmatpush1.bf16.msra.mxu0 0
    %307 = vmatprep.subr.bf16.mxu0 0
    %308 = vmatpush1.bf16.msra.mxu0 0
    %309 = vmatprep.subr.bf16.mxu0 0
    %310 = vmatpush1.bf16.msra.mxu0 0
    %311 = vmatprep.subr.bf16.mxu0 0
    %312 = vmatpush1.bf16.msra.mxu0 0
    %313 = vmatprep.mubr.bf16.mxu0 0
    %314 = vmatmul.mubr.bf16.gmra.mrb[0].mxu0 %v209
    %v315 = vpop.f32.mrb[0].mxu0
    %v316 = vadd.f32 %v231, %v315
    %v317 = vpop.f32.mrb[0].mxu0
    %v318 = vpop.f32.mrb[0].mxu0
    %v319 = vadd.f32 %v231, %v318
    %v320 = vpop.f32.mrb[0].mxu0
    %321 = vdwg.mxu0
    %vm322 = vcmp.ge.f32.partialorder %v316, 0.0
    %vm323 = vcmp.ge.f32.partialorder %v319, 0.0
    %v324 = vmul.f32 %v316, 0.01
    %v325 = vmul.f32 %v319, 0.01
    %v326 = vsel %vm322, %v316, %v324
    %v327 = vsel %vm323, %v319, %v325
    %v328 = vpack.c.bf16 %v327, %v326
    %v329 = vld [vmem:[#allocation8] sm:$0xf]
    %v330 = vld [vmem:[#allocation8 + $0x4] sm:$0xf]
    %v331 = vld [vmem:[#allocation8 + $0x8] sm:$0xf]
    %v332 = vld [vmem:[#allocation8 + $0xc] sm:$0xf]
    %v333 = vld [vmem:[#allocation8 + $0x10] sm:$0xf]
    %v334 = vld [vmem:[#allocation8 + $0x14] sm:$0xf]
    %v335 = vld [vmem:[#allocation8 + $0x18] sm:$0xf]
    %v336 = vld [vmem:[#allocation8 + $0x1c] sm:$0xf]
    %v337 = vld [vmem:[#allocation8 + $0x20] sm:$0xf]
    %v338 = vld [vmem:[#allocation8 + $0x24] sm:$0xf]
    %v339 = vld [vmem:[#allocation8 + $0x28] sm:$0xf]
    %v340 = vld [vmem:[#allocation8 + $0x2c] sm:$0xf]
    %v341 = vld [vmem:[#allocation8 + $0x30] sm:$0xf]
    %v342 = vld [vmem:[#allocation8 + $0x34] sm:$0xf]
    %v343 = vld [vmem:[#allocation8 + $0x38] sm:$0xf]
    %v344 = vld [vmem:[#allocation8 + $0x3c] sm:$0xf]
    %v345 = vld [vmem:[%s6] sm:$0x1]
    %v347 = vlaneseq
    %v348 = vshrl.u32 %v347, 7
    %v349 = vsub.s32 0, %v348
    %v350 = vrot.slane %v345, %v349
    %v368 = vunpack.c.l.b16 %v329
    %v369 = vunpack.c.l.b16 %v330
    %v370 = vunpack.c.l.b16 %v331
    %v371 = vunpack.c.l.b16 %v332
    %v372 = vunpack.c.l.b16 %v333
    %v373 = vunpack.c.l.b16 %v334
    %v374 = vunpack.c.l.b16 %v335
    %v375 = vunpack.c.l.b16 %v336
    %v376 = vunpack.c.l.b16 %v337
    %v377 = vunpack.c.l.b16 %v338
    %v378 = vunpack.c.l.b16 %v339
    %v379 = vunpack.c.l.b16 %v340
    %v380 = vunpack.c.l.b16 %v341
    %v381 = vunpack.c.l.b16 %v342
    %v382 = vunpack.c.l.b16 %v343
    %v383 = vunpack.c.l.b16 %v344
    %v384 = vpack.c.b16 %v369, %v368
    %v385 = vpack.c.b16 %v371, %v370
    %v386 = vpack.c.b16 %v373, %v372
    %v387 = vpack.c.b16 %v375, %v374
    %v388 = vpack.c.b16 %v377, %v376
    %v389 = vpack.c.b16 %v379, %v378
    %v390 = vpack.c.b16 %v381, %v380
    %v391 = vpack.c.b16 %v383, %v382
    %400 = vmatprep.subr.bf16.mxu0 0
    %401 = vmatpush1.bf16.msra.mxu0 %v384
    %402 = vmatprep.subr.bf16.mxu0 0
    %403 = vmatpush1.bf16.msra.mxu0 %v385
    %404 = vmatprep.subr.bf16.mxu0 0
    %405 = vmatpush1.bf16.msra.mxu0 %v386
    %406 = vmatprep.subr.bf16.mxu0 0
    %407 = vmatpush1.bf16.msra.mxu0 %v387
    %408 = vmatprep.subr.bf16.mxu0 0
    %409 = vmatpush1.bf16.msra.mxu0 %v388
    %410 = vmatprep.subr.bf16.mxu0 0
    %411 = vmatpush1.bf16.msra.mxu0 %v389
    %412 = vmatprep.subr.bf16.mxu0 0
    %413 = vmatpush1.bf16.msra.mxu0 %v390
    %414 = vmatprep.subr.bf16.mxu0 0
    %415 = vmatpush1.bf16.msra.mxu0 %v391
    %416 = vmatprep.subr.bf16.mxu0 0
    %417 = vmatpush1.bf16.msra.mxu0 0
    %418 = vmatprep.subr.bf16.mxu0 0
    %419 = vmatpush1.bf16.msra.mxu0 0
    %420 = vmatprep.subr.bf16.mxu0 0
    %421 = vmatpush1.bf16.msra.mxu0 0
    %422 = vmatprep.subr.bf16.mxu0 0
    %423 = vmatpush1.bf16.msra.mxu0 0
    %424 = vmatprep.subr.bf16.mxu0 0
    %425 = vmatpush1.bf16.msra.mxu0 0
    %426 = vmatprep.subr.bf16.mxu0 0
    %427 = vmatpush1.bf16.msra.mxu0 0
    %428 = vmatprep.subr.bf16.mxu0 0
    %429 = vmatpush1.bf16.msra.mxu0 0
    %430 = vmatprep.subr.bf16.mxu0 0
    %431 = vmatpush1.bf16.msra.mxu0 0
    %432 = vmatprep.mubr.bf16.mxu0 0
    %433 = vmatmul.mubr.bf16.gmra.mrb[0].mxu0 %v328
    %v434 = vpop.f32.mrb[0].mxu0
    %v435 = vadd.f32 %v350, %v434
    %v436 = vpop.f32.mrb[0].mxu0
    %v437 = vpop.f32.mrb[0].mxu0
    %v438 = vadd.f32 %v350, %v437
    %v439 = vpop.f32.mrb[0].mxu0
    %440 = vdwg.mxu0
    %441 = vst [vmem:[#allocation10] sm:$0xff] %v435
    %442 = vst [vmem:[#allocation10 + $0x8] sm:$0xff] %v438
    // Predicated region
    $region46: #{tpu_custom_call.1} parent=1 // pred_check
      _
    $region47: #{tpu_custom_call.1} parent=1 // pred_check_branch
      %444 = sbr.rel (0) target = $region49
    $region48: #{tpu_custom_call.1} parent=1 // pred_region
      %s446 = ssub.s32 256, 256
      %447 = vsyncadd [#allocation4], %s446
      %s448 = sshll.u32 [#allocation10], 4
      %s449 = int_to_ptr.vmem [resolvable:$true] %s448
      %454 = dma.vmem_to_hbm [thread:$0]  %s449, 256, %s7, [#allocation4], 128, 128, 8
    $region49: #{tpu_custom_call.1} parent=1 // pred_fallthru
      _
    // Predicated region
    $region50: #{tpu_custom_call.1} parent=1 // pred_check
      _
    $region51: #{tpu_custom_call.1} parent=1 // pred_check_branch
      %456 = sbr.rel (0) target = $region53
    $region52: #{tpu_custom_call.1} parent=1 // pred_region
      %457 = dma.done [#allocation4], 256
    $region53: #{tpu_custom_call.1} parent=1 // pred_fallthru
      _
    %458 = vsyncpa [#allocation3], 1
    %459 = vsyncpa [#allocation6], 1
    %460 = vsyncpa [#allocation9], 1
    %461 = vsyncpa [#allocation4], 1

</llo_original>
